<compile_context>
chip_gen: v7x
topology: tpu7x:2x2x1
jax: 0.10.0
libtpu: 0.0.40
codegen_flags: <defaults>
</compile_context>

<pallas_src>
import math

import jax
import jax.numpy as jnp
from jax.experimental import pallas as pl
from jax.experimental.pallas import tpu as pltpu

_LANE = 128
_TARGET_BLOCK_BYTES = 4 * 1024 * 1024   # ~4 MiB blocks: safe on v5e/v6e/v7x VMEM budgets
_VMEM_LIMIT_BYTES = 32 * 1024 * 1024    # 2x double-buffered 4 MiB in/out blocks + slack


def _copy_kernel(x_ref, o_ref):
    # Whole-tile VMEM identity copy (purely HBM/DMA bound).
    o_ref[...] = x_ref[...]


def _sublane_multiple(dtype):
    # f32 -> 8, bf16/f16 -> 16, int8/fp8 -> 32 (sublane packing granularity).
    itemsize = jnp.dtype(dtype).itemsize
    return max(8, 32 // itemsize)


def _round_up(n, m):
    return ((n + m - 1) // m) * m


def _pick_tile_rows(rows, dtype, block_bytes):
    """Fixed sublane-aligned row tile of roughly `block_bytes`, clamped so the
    block never exceeds the (sublane-padded) slab itself.  No divisibility
    requirement: the grid uses cdiv and Pallas masks the ragged last block."""
    sub = _sublane_multiple(dtype)
    itemsize = jnp.dtype(dtype).itemsize
    tile_r = (block_bytes // (_LANE * itemsize)) // sub * sub
    tile_r = max(sub, tile_r)
    tile_r = min(tile_r, _round_up(rows, sub))
    return tile_r


def _pallas_copy_2d(x2d, block_bytes=_TARGET_BLOCK_BYTES):
    """Copy a [R, 128] slab through a Pallas kernel with large row tiles."""
    R, C = x2d.shape
    tile_r = _pick_tile_rows(R, x2d.dtype, block_bytes)
    grid = (pl.cdiv(R, tile_r),)
    itemsize = jnp.dtype(x2d.dtype).itemsize
    return pl.pallas_call(
        _copy_kernel,
        out_shape=jax.ShapeDtypeStruct((R, C), x2d.dtype),
        grid_spec=pltpu.PrefetchScalarGridSpec(
            num_scalar_prefetch=0,
            grid=grid,
            in_specs=[pl.BlockSpec((tile_r, C), lambda i: (i, 0))],
            out_specs=pl.BlockSpec((tile_r, C), lambda i: (i, 0)),
        ),
        compiler_params=pltpu.CompilerParams(
            dimension_semantics=("parallel",),
            vmem_limit_bytes=_VMEM_LIMIT_BYTES,
        ),
        cost_estimate=pl.CostEstimate(
            flops=0, transcendentals=0, bytes_accessed=2 * R * C * itemsize
        ),
    )(x2d)


def _pallas_materialized_reshape(x, shape):
    """Out-of-place reshape: stream the data once through the copy kernel."""
    total = x.size
    if total == 0 or total % _LANE != 0:
        # Ragged flat length: a pad+slice round trip through HBM would cost
        # more than it saves; fall back to the metadata-only reshape.
        return jnp.reshape(x, shape)
    rows = total // _LANE
    slab = jnp.reshape(x, (rows, _LANE))           # metadata-only
    out_slab = _pallas_copy_2d(slab)               # single HBM read + write
    return jnp.reshape(out_slab, shape)            # metadata-only


class Reshape:
    """JAX/Pallas equivalent of torch `x.view(shape)`.

    Default path is a metadata-only jnp.reshape (reshape of a contiguous
    array moves zero bytes).  Pass materialize=True only if a physically
    fresh, copied buffer is explicitly required.
    """

    def __init__(self, shape, materialize=False):
        self.shape = tuple(shape)
        self.materialize = materialize

    def _resolve_shape(self, total):
        shape = list(self.shape)
        neg = [i for i, s in enumerate(shape) if s == -1]
        if len(neg) > 1:
            raise ValueError("only one dimension can be inferred (-1)")
        if neg:
            known = 1
            for j, s in enumerate(shape):
                if j != neg[0]:
                    known *= s
            if known == 0 or total % known != 0:
                raise ValueError(
                    f"cannot reshape array of size {total} into shape {self.shape}")
            shape[neg[0]] = total // known
        elif math.prod(shape) != total:
            raise ValueError(
                f"cannot reshape array of size {total} into shape {self.shape}")
        return tuple(shape)

    def __call__(self, x):
        shape = self._resolve_shape(x.size)
        if not self.materialize:
            # Highest-value fix from review: reshape is metadata-only.
            return jnp.reshape(x, shape)
        return _pallas_materialized_reshape(x, shape)


if __name__ == "__main__":
    key = jax.random.PRNGKey(0)
    k1, k2, k3 = jax.random.split(key, 3)

    # 1) Default (metadata-only) path: small NCHW feature map (2, 4, 16, 16).
    x_small = jax.random.normal(k1, (2, 4, 16, 16), dtype=jnp.float32)
    y_small = jax.block_until_ready(Reshape((2, -1))(x_small))
    assert y_small.shape == (2, 1024), y_small.shape
    assert y_small.dtype == x_small.dtype
    assert bool(jnp.all(y_small == jnp.reshape(x_small, (2, 1024))))

    # 2) Explicit materialized path: exercises the Pallas copy kernel.
    y_mat = jax.block_until_ready(Reshape((2, -1), materialize=True)(x_small))
    assert y_mat.shape == (2, 1024), y_mat.shape
    assert y_mat.dtype == x_small.dtype
    assert bool(jnp.all(y_mat == jnp.reshape(x_small, (2, 1024))))

    # 3) Materialized bf16 path: dtype-aware (sublane=16) tile selection.
    x_bf16 = jax.random.normal(k2, (4, 8, 32, 32), dtype=jnp.float32).astype(jnp.bfloat16)
    y_bf16 = jax.block_until_ready(Reshape((4, 8, -1), materialize=True)(x_bf16))
    assert y_bf16.shape == (4, 8, 1024), y_bf16.shape
    assert y_bf16.dtype == jnp.bfloat16
    assert bool(jnp.all(y_bf16 == jnp.reshape(x_bf16, (4, 8, 1024))))

    # 4) Robustness of the cdiv grid + ragged last block (rows % sublane != 0,
    #    rows % tile_r != 0): 40 rows with a tiny forced block size -> grid=2,
    #    last block masked by Pallas instead of a whole-array fallback.
    x_ragged = jax.random.normal(k3, (40, 128), dtype=jnp.float32)
    y_ragged = jax.block_until_ready(_pallas_copy_2d(x_ragged, block_bytes=16 * 1024))
    assert y_ragged.shape == (40, 128), y_ragged.shape
    assert bool(jnp.all(y_ragged == x_ragged))

    print("KERNEL_OK")
</pallas_src>

<mosaic_0001>
module attributes {stable_mosaic.version = 11 : i64} {
  func.func @_copy_kernel(%arg0: i32, %arg1: memref<16x128xf32, #tpu.memory_space<vmem>>, %arg2: memref<16x128xf32, #tpu.memory_space<vmem>>) attributes {dimension_semantics = [#tpu.dimension_semantics<parallel>], iteration_bounds = array<i64: 1>, scalar_prefetch = 0 : i64, scratch_operands = 0 : i64, tpu.core_type = #tpu.core_type<tc>, window_params = [{transform_indices = @transform_0, window_bounds = array<i64: 16, 128>}, {transform_indices = @transform_1, window_bounds = array<i64: 16, 128>}]} {
    %c0 = arith.constant 0 : index
    %c0_0 = arith.constant 0 : index
    %0 = vector.load %arg1[%c0, %c0_0] : memref<16x128xf32, #tpu.memory_space<vmem>>, vector<16x128xf32>
    %c0_1 = arith.constant 0 : index
    %c0_2 = arith.constant 0 : index
    %1 = vector.load %arg2[%c0_1, %c0_2] : memref<16x128xf32, #tpu.memory_space<vmem>>, vector<16x128xf32>
    tpu.vector_store %arg2[%c0_1, %c0_2], %0 {strides = array<i32>} : memref<16x128xf32, #tpu.memory_space<vmem>>, vector<16x128xf32>,
    return
  }
  func.func @transform_0(%arg0: i32) -> (i32, i32) {
    %c0_i32 = arith.constant 0 : i32
    %c0_i32_0 = arith.constant 0 : i32
    return %arg0, %c0_i32 : i32, i32
  }
  func.func @transform_1(%arg0: i32) -> (i32, i32) {
    %c0_i32 = arith.constant 0 : i32
    %c0_i32_0 = arith.constant 0 : i32
    return %arg0, %c0_i32 : i32, i32
  }
}

</mosaic_0001>

<llo_original>
// kernel: tpu_custom_call.1
$region0: #{tpu_custom_call.1}
  #allocation0 [shape = 'u32[]', space=smem, size = 0x4, offset = 0x4, fixed_abs, tag = 'smem constant byte address 0x4 - core index']
  #allocation1 [shape = 'u32[144,128]{1,0:T(1,128)}', space=vmem, size = 0x12000, scoped, tag = 'internal scratch']
  %s0 = inlined_call_operand.hbm [shape: f32[16,128], index: 0, kind: input, shape index: {}]
  %s1 = inlined_call_operand.hbm [shape: f32[16,128], index: 1, kind: output, shape index: {}]
  %s2 = sld [smem:[#allocation0]]
  $region18: #{tpu_custom_call.1} parent=0
    _
  %s4 = ssub.s32 1, %s2
  %s5 = scalar_select 0, %s4, %s2
  $region1: #{tpu_custom_call.1} parent=0
    #allocation2 [shape = 'u8[8192]{0}', space=vmem, size = 0x2000, scoped, tag = 'input window, operand 0, single buffered']
    #allocation3 [shape = 's32[1]{0}', space=sflag, size = 0x4, scoped, tag = 'scoped memory for tpu_custom_call.1']
    #allocation4 [shape = 's32[1]{0}', space=sflag, size = 0x4, scoped, tag = 'scoped memory for tpu_custom_call.1']
    #allocation5 [shape = 'u8[8192]{0}', space=vmem, size = 0x2000, scoped, tag = 'output window, operand 0, single buffered']
    %6 = vsyncpa [#allocation3], 0
    %7 = vsyncpa [#allocation4], 0
    // Predicated region
    $region2: #{tpu_custom_call.1} parent=1 // pred_check
      _
    $region3: #{tpu_custom_call.1} parent=1 // pred_check_branch
      %9 = sbr.rel (0) target = $region5
    $region4: #{tpu_custom_call.1} parent=1 // pred_region
      %s11 = ssub.s32 256, 256
      %12 = vsyncadd [#allocation3], %s11
      %s13 = sshll.u32 [#allocation2], 4
      %s14 = int_to_ptr.vmem [resolvable:$true] %s13
      %19 = dma.hbm_to_vmem [thread:$0]  %s0, 256, %s14, [#allocation3], 128, 128, 8
    $region5: #{tpu_custom_call.1} parent=1 // pred_fallthru
      _
    // Predicated region
    $region6: #{tpu_custom_call.1} parent=1 // pred_check
      _
    $region7: #{tpu_custom_call.1} parent=1 // pred_check_branch
      %21 = sbr.rel (0) target = $region9
    $region8: #{tpu_custom_call.1} parent=1 // pred_region
      %22 = dma.done [#allocation3], 256
    $region9: #{tpu_custom_call.1} parent=1 // pred_fallthru
      _
    %v23 = vld [vmem:[#allocation2] sm:$0xff]
    %v24 = vld [vmem:[#allocation2 + $0x8] sm:$0xff]
    %25 = vst [vmem:[#allocation5] sm:$0xff] %v23
    %26 = vst [vmem:[#allocation5 + $0x8] sm:$0xff] %v24
    // Predicated region
    $region10: #{tpu_custom_call.1} parent=1 // pred_check
      _
    $region11: #{tpu_custom_call.1} parent=1 // pred_check_branch
      %28 = sbr.rel (0) target = $region13
    $region12: #{tpu_custom_call.1} parent=1 // pred_region
      %s30 = ssub.s32 256, 256
      %31 = vsyncadd [#allocation4], %s30
      %s32 = sshll.u32 [#allocation5], 4
      %s33 = int_to_ptr.vmem [resolvable:$true] %s32
      %38 = dma.vmem_to_hbm [thread:$0]  %s33, 256, %s1, [#allocation4], 128, 128, 8
    $region13: #{tpu_custom_call.1} parent=1 // pred_fallthru
      _
    // Predicated region
    $region14: #{tpu_custom_call.1} parent=1 // pred_check
      _
    $region15: #{tpu_custom_call.1} parent=1 // pred_check_branch
      %40 = sbr.rel (0) target = $region17
    $region16: #{tpu_custom_call.1} parent=1 // pred_region
      %41 = dma.done [#allocation4], 256
    $region17: #{tpu_custom_call.1} parent=1 // pred_fallthru
      _
    %42 = vsyncpa [#allocation3], 1
    %43 = vsyncpa [#allocation4], 1

</llo_original>
